<compile_context>
chip_gen: v5e
topology: v5e:2x2
jax: 0.10.0
libtpu: 0.0.40
codegen_flags: <defaults>
</compile_context>

<pallas_src>
import functools

import jax
import jax.numpy as jnp
from jax import lax
from jax.experimental import pallas as pl
from jax.experimental.pallas import tpu as pltpu

LANES = 128        # vreg lane width
SUBLANES = 8       # vreg sublane count
CHUNK_ROWS = 512   # in-kernel compute sub-tile (256 KiB f32 per temporary)


@functools.lru_cache(maxsize=1)
def _tpu_defaults():
    """Return (tensorcores_per_device, default_max_tile_rows)."""
    kind = ""
    try:
        dev = jax.devices()[0]
        if dev.platform == "tpu":
            kind = dev.device_kind.lower()
    except Exception:
        pass
    is_v5e = ("v5 lite" in kind) or ("v5e" in kind) or ("v5lite" in kind)
    # v5e: 16 MiB default scoped VMEM -> keep 2 MiB input blocks (4096 rows).
    # v6e/v7x: 8192 rows (4 MiB blocks, 16 MiB double-buffered) within the
    # explicit 32 MiB scoped limit set below (v7x physical VMEM is 64 MiB).
    max_rows = 4096 if is_v5e else 8192
    # v7x is the only generation with 2 TensorCores per device.
    num_tc = 2 if ("7" in kind) else 1
    return num_tc, max_rows


def _quantile_loss_kernel(yhat_ref, y_ref, out_ref, acc_ref, *,
                          quantile, tile_rows, chunk_rows, steps_per_part,
                          rows_valid, emit_mask):
    p = pl.program_id(0)   # part (split across TensorCores on v7x)
    j = pl.program_id(1)   # reduction step within this part

    @pl.when(j == 0)
    def _():
        acc_ref[...] = jnp.zeros_like(acc_ref)

    q_pos = jnp.float32(quantile)
    q_neg = jnp.float32(quantile - 1.0)
    num_chunks = tile_rows // chunk_rows
    # Logical (un-clamped) start row of this block; the input index_map clamps
    # to the last real block, so masking uses the logical position.
    row0 = (p * steps_per_part + j) * tile_rows

    def pinball_chunk(c, masked):
        r0 = pl.multiple_of(c * chunk_rows, chunk_rows)
        yh = yhat_ref[pl.ds(r0, chunk_rows), :].astype(jnp.float32)
        yy = y_ref[pl.ds(r0, chunk_rows), :].astype(jnp.float32)
        res = yy - yh
        # pinball(res) = max((q-1)*res, q*res) == res * (q if res>=0 else q-1)
        pin = res * jnp.where(res >= 0.0, q_pos, q_neg)
        if masked:
            # Rows at/after rows_valid are block overshoot past the array end
            # or whole clamped duplicate blocks from the part split.
            rid = (row0 + c * chunk_rows
                   + lax.broadcasted_iota(jnp.int32, (chunk_rows, LANES), 0))
            pin = jnp.where(rid < rows_valid, pin, jnp.float32(0.0))
        return pin

    def accumulate_block(masked):
        def body(c, carry):
            pin = pinball_chunk(c, masked)
            # vreg-shaped accumulation: plain VPU adds, no per-step XLU reduce.
            acc_ref[...] += pin.reshape(-1, SUBLANES, LANES).sum(axis=0)
            return carry
        lax.fori_loop(0, num_chunks, body, 0)

    if emit_mask:
        in_bounds = row0 + tile_rows <= rows_valid

        @pl.when(in_bounds)            # interior blocks: no mask work at all
        def _():
            accumulate_block(False)

        @pl.when(jnp.logical_not(in_bounds))   # last / clamped blocks only
        def _():
            accumulate_block(True)
    else:
        accumulate_block(False)

    @pl.when(j == pl.num_programs(1) - 1)
    def _():
        out_ref[0] = acc_ref[...]


def _pinball_sum_f32(y_hat_flat, y_flat, quantile):
    res = y_flat.astype(jnp.float32) - y_hat_flat.astype(jnp.float32)
    q = jnp.float32(quantile)
    return jnp.sum(jnp.maximum((q - 1.0) * res, q * res))


def quantile_loss(y_hat, y, quantile, *, max_tile_rows=None, num_parts=None):
    """Pallas TPU implementation of QuantileLoss.forward(y_hat, y)."""
    assert y_hat.shape == y.shape, "y_hat and y must share a shape"
    n_true = int(y_hat.size)
    assert n_true > 0, "empty input"

    # Free metadata change for contiguous row-major inputs; strided/transposed
    # callers would pay an XLA relayout copy here.
    yhat_flat = jnp.ravel(y_hat)
    y_flat = jnp.ravel(y)

    # Sub-lane-width remainder (< 128 elements): fold in with a tiny jnp
    # reduction instead of jnp.pad-ing (re-materialising) both full arrays.
    tail = n_true % LANES
    n128 = n_true - tail
    extra = jnp.float32(0.0)
    if tail:
        extra = _pinball_sum_f32(yhat_flat[n128:], y_flat[n128:], quantile)

    rows = n128 // LANES
    if rows < SUBLANES:
        # Fewer than 8 full 128-wide rows: not worth a kernel launch.
        if rows:
            extra = extra + _pinball_sum_f32(yhat_flat[:n128], y_flat[:n128],
                                             quantile)
        return extra / jnp.float32(n_true)

    if tail:
        # Only ragged (size % 128 != 0) inputs pay this prefix slice.
        yhat_flat = yhat_flat[:n128]
        y_flat = y_flat[:n128]
    yhat2d = yhat_flat.reshape(rows, LANES)   # zero-copy for aligned sizes
    y2d = y_flat.reshape(rows, LANES)

    num_tc, default_tile = _tpu_defaults()
    if max_tile_rows is None:
        max_tile_rows = default_tile
    mt = max(SUBLANES, (int(max_tile_rows) // SUBLANES) * SUBLANES)
    tile_rows = min(mt, (rows // SUBLANES) * SUBLANES)   # multiple of 8, >= 8
    chunk_rows = min(CHUNK_ROWS, tile_rows)
    if tile_rows % chunk_rows:
        tile_rows = (tile_rows // chunk_rows) * chunk_rows

    total_blocks = pl.cdiv(rows, tile_rows)
    if num_parts is None:
        num_parts = num_tc
    num_parts = max(1, min(int(num_parts), total_blocks))
    steps_per_part = pl.cdiv(total_blocks, num_parts)

    # Static: is any overshoot/duplicate masking ever needed for this shape?
    emit_mask = (rows % tile_rows != 0) or (num_parts * steps_per_part
                                            != total_blocks)

    def in_map(p, j):
        # Clamp so grid overshoot in the last part re-reads the final block;
        # its contribution is zeroed by the in-kernel row mask.
        return (jnp.minimum(p * steps_per_part + j, total_blocks - 1), 0)

    kernel = functools.partial(
        _quantile_loss_kernel,
        quantile=float(quantile),
        tile_rows=tile_rows,
        chunk_rows=chunk_rows,
        steps_per_part=steps_per_part,
        rows_valid=rows,
        emit_mask=emit_mask,
    )

    partial_sums = pl.pallas_call(
        kernel,
        out_shape=jax.ShapeDtypeStruct((num_parts, SUBLANES, LANES),
                                       jnp.float32),
        grid_spec=pltpu.PrefetchScalarGridSpec(
            num_scalar_prefetch=0,
            grid=(num_parts, steps_per_part),
            in_specs=[
                pl.BlockSpec((tile_rows, LANES), in_map),
                pl.BlockSpec((tile_rows, LANES), in_map),
            ],
            out_specs=pl.BlockSpec((1, SUBLANES, LANES), lambda p, j: (p, 0, 0)),
            scratch_shapes=[pltpu.VMEM((SUBLANES, LANES), jnp.float32)],
        ),
        compiler_params=pltpu.CompilerParams(
            dimension_semantics=("parallel", "arbitrary"),
            vmem_limit_bytes=32 << 20,
        ),
    )(yhat2d, y2d)

    # One tiny final reduction (num_parts * 8 * 128 floats) + mean divide.
    return (jnp.sum(partial_sums) + extra) / jnp.float32(n_true)


def _reference(y_hat, y, quantile):
    res = y.astype(jnp.float32) - y_hat.astype(jnp.float32)
    return jnp.mean(jnp.maximum((quantile - 1.0) * res, quantile * res))


if __name__ == "__main__":
    key = jax.random.PRNGKey(0)
    keys = jax.random.split(key, 6)
    quantile = 0.9

    # 1) (B, C, H, W) regression output; size % 128 == 0 -> zero-copy, no mask.
    shape = (2, 4, 16, 16)
    y_hat = jax.random.normal(keys[0], shape, dtype=jnp.float32)
    y = jax.random.normal(keys[1], shape, dtype=jnp.float32)
    loss = jax.block_until_ready(quantile_loss(y_hat, y, quantile))
    ref = _reference(y_hat, y, quantile)
    assert jnp.allclose(loss, ref, rtol=1e-5, atol=1e-6), (loss, ref)

    # 2) Ragged size (% 128 != 0): tiny jnp tail + kernel over the 128-aligned
    #    prefix; 10 rows / 8-row tiles exercises the gated overshoot mask.
    shape2 = (3, 7, 67)
    y_hat2 = jax.random.normal(keys[2], shape2, dtype=jnp.float32)
    y2 = jax.random.normal(keys[3], shape2, dtype=jnp.float32)
    loss2 = jax.block_until_ready(quantile_loss(y_hat2, y2, quantile))
    ref2 = _reference(y_hat2, y2, quantile)
    assert jnp.allclose(loss2, ref2, rtol=1e-5, atol=1e-6), (loss2, ref2)

    # 3) Multi-block path with a small forced tile (24 rows, 16-row tiles):
    #    exercises partial-last-block masking and the part accumulator merge.
    shape3 = (2, 12, 128)
    y_hat3 = jax.random.normal(keys[4], shape3, dtype=jnp.float32)
    y3 = jax.random.normal(keys[5], shape3, dtype=jnp.float32)
    loss3 = jax.block_until_ready(
        quantile_loss(y_hat3, y3, quantile, max_tile_rows=16))
    ref3 = _reference(y_hat3, y3, quantile)
    assert jnp.allclose(loss3, ref3, rtol=1e-5, atol=1e-6), (loss3, ref3)

    print("KERNEL_OK")
</pallas_src>

<mosaic_0001>
module attributes {stable_mosaic.version = 11 : i64} {
  func.func @_quantile_loss_kernel(%arg0: i32, %arg1: i32, %arg2: memref<16x128xf32, #tpu.memory_space<vmem>>, %arg3: memref<16x128xf32, #tpu.memory_space<vmem>>, %arg4: memref<1x8x128xf32, #tpu.memory_space<vmem>>, %arg5: memref<8x128xf32, #tpu.memory_space<vmem>>) attributes {dimension_semantics = [#tpu.dimension_semantics<parallel>, #tpu.dimension_semantics<arbitrary>], iteration_bounds = array<i64: 1, 1>, scalar_prefetch = 0 : i64, scratch_operands = 1 : i64, tpu.core_type = #tpu.core_type<tc>, window_params = [{transform_indices = @transform_0, window_bounds = array<i64: 16, 128>}, {transform_indices = @transform_1, window_bounds = array<i64: 16, 128>}, {transform_indices = @transform_2, window_bounds = array<i64: 1, 8, 128>}]} {
    %c0_i32 = arith.constant 0 : i32
    %0 = arith.cmpi eq, %arg1, %c0_i32 : i32
    %1 = arith.extui %0 : i1 to i32
    %c0_i32_0 = arith.constant 0 : i32
    %2 = arith.cmpi ne, %1, %c0_i32_0 : i32
    scf.if %2 {
      %cst_12 = arith.constant 0.000000e+00 : f32
      %24 = vector.broadcast %cst_12 : f32 to vector<8x128xf32>
      %c0_13 = arith.constant 0 : index
      %c0_14 = arith.constant 0 : index
      %25 = vector.load %arg5[%c0_13, %c0_14] : memref<8x128xf32, #tpu.memory_space<vmem>>, vector<8x128xf32>
      tpu.vector_store %arg5[%c0_13, %c0_14], %24 {strides = array<i32>} : memref<8x128xf32, #tpu.memory_space<vmem>>, vector<8x128xf32>,
    } else {
    }
    %cst = arith.constant 0.899999976 : f32
    %cst_1 = arith.constant -1.000000e-01 : f32
    %c0_i32_2 = arith.constant 0 : i32
    %c16_i32 = arith.constant 16 : i32
    %3 = arith.muli %c0_i32_2, %c16_i32 : i32
    %4 = tpu.assume_multiple %3, 16 : i32
    %5 = arith.index_cast %4 : i32 to index
    %c0 = arith.constant 0 : index
    %6 = vector.load %arg2[%5, %c0] : memref<16x128xf32, #tpu.memory_space<vmem>>, vector<16x128xf32>
    %7 = arith.index_cast %4 : i32 to index
    %c0_3 = arith.constant 0 : index
    %8 = vector.load %arg3[%7, %c0_3] : memref<16x128xf32, #tpu.memory_space<vmem>>, vector<16x128xf32>
    %9 = arith.subf %8, %6 : vector<16x128xf32>
    %cst_4 = arith.constant 0.000000e+00 : f32
    %10 = vector.broadcast %cst_4 : f32 to vector<16x128xf32>
    %11 = arith.cmpf oge, %9, %10 : vector<16x128xf32>
    %12 = vector.broadcast %cst : f32 to vector<16x128xf32>
    %13 = vector.broadcast %cst_1 : f32 to vector<16x128xf32>
    %14 = arith.select %11, %12, %13 : vector<16x128xi1>, vector<16x128xf32>
    %15 = arith.mulf %9, %14 : vector<16x128xf32>
    %c0_5 = arith.constant 0 : index
    %c0_6 = arith.constant 0 : index
    %16 = vector.load %arg5[%c0_5, %c0_6] : memref<8x128xf32, #tpu.memory_space<vmem>>, vector<8x128xf32>
    %17 = vector.shape_cast %15 : vector<16x128xf32> to vector<2x8x128xf32>
    %cst_7 = arith.constant dense<0.000000e+00> : vector<8x128xf32>
    %18 = vector.multi_reduction <add>, %17, %cst_7 [0] : vector<2x8x128xf32> to vector<8x128xf32>
    %19 = arith.addf %16, %18 : vector<8x128xf32>
    %c0_8 = arith.constant 0 : index
    %c0_9 = arith.constant 0 : index
    %20 = vector.load %arg5[%c0_8, %c0_9] : memref<8x128xf32, #tpu.memory_space<vmem>>, vector<8x128xf32>
    tpu.vector_store %arg5[%c0_8, %c0_9], %19 {strides = array<i32>} : memref<8x128xf32, #tpu.memory_space<vmem>>, vector<8x128xf32>,
    %c1_i32 = arith.constant 1 : i32
    %c0_i32_10 = arith.constant 0 : i32
    %21 = arith.cmpi eq, %arg1, %c0_i32_10 : i32
    %22 = arith.extui %21 : i1 to i32
    %c0_i32_11 = arith.constant 0 : i32
    %23 = arith.cmpi ne, %22, %c0_i32_11 : i32
    scf.if %23 {
      %c0_12 = arith.constant 0 : index
      %c0_13 = arith.constant 0 : index
      %24 = vector.load %arg5[%c0_12, %c0_13] : memref<8x128xf32, #tpu.memory_space<vmem>>, vector<8x128xf32>
      %c0_14 = arith.constant 0 : index
      %c0_15 = arith.constant 0 : index
      %c0_16 = arith.constant 0 : index
      %25 = vector.load %arg4[%c0_14, %c0_15, %c0_16] : memref<1x8x128xf32, #tpu.memory_space<vmem>>, vector<1x8x128xf32>
      %26 = vector.shape_cast %25 : vector<1x8x128xf32> to vector<8x128xf32>
      %27 = vector.shape_cast %24 : vector<8x128xf32> to vector<1x8x128xf32>
      tpu.vector_store %arg4[%c0_14, %c0_15, %c0_16], %27 {strides = array<i32>} : memref<1x8x128xf32, #tpu.memory_space<vmem>>, vector<1x8x128xf32>,
    } else {
    }
    return
  }
  func.func @transform_0(%arg0: i32, %arg1: i32) -> (i32, i32) {
    %c1_i32 = arith.constant 1 : i32
    %0 = arith.muli %arg0, %c1_i32 : i32
    %1 = arith.addi %0, %arg1 : i32
    %c0_i32 = arith.constant 0 : i32
    %2 = arith.minsi %1, %c0_i32 : i32
    %c0_i32_0 = arith.constant 0 : i32
    %c0_i32_1 = arith.constant 0 : i32
    return %2, %c0_i32_0 : i32, i32
  }
  func.func @transform_1(%arg0: i32, %arg1: i32) -> (i32, i32) {
    %c1_i32 = arith.constant 1 : i32
    %0 = arith.muli %arg0, %c1_i32 : i32
    %1 = arith.addi %0, %arg1 : i32
    %c0_i32 = arith.constant 0 : i32
    %2 = arith.minsi %1, %c0_i32 : i32
    %c0_i32_0 = arith.constant 0 : i32
    %c0_i32_1 = arith.constant 0 : i32
    return %2, %c0_i32_0 : i32, i32
  }
  func.func @transform_2(%arg0: i32, %arg1: i32) -> (i32, i32, i32) {
    %c0_i32 = arith.constant 0 : i32
    %c0_i32_0 = arith.constant 0 : i32
    %c0_i32_1 = arith.constant 0 : i32
    return %arg0, %c0_i32, %c0_i32_0 : i32, i32, i32
  }
}

</mosaic_0001>

<llo_original>
// kernel: tpu_custom_call.1
$region0: #{tpu_custom_call.1}
  #allocation0 [shape = 'u32[]', space=smem, size = 0x4, offset = 0x4, fixed_abs, tag = 'smem constant byte address 0x4 - core index']
  #allocation1 [shape = 'u32[72,128]{1,0:T(1,128)}', space=vmem, size = 0x9000, scoped, tag = 'internal scratch']
  #allocation2 [shape = 'f32[8,128]{1,0:T(8,128)}', space=vmem, size = 0x1000, scoped, tag = 'scratch operand']
  %s0 = inlined_call_operand.hbm [shape: f32[16,128], index: 0, kind: input, shape index: {}]
  %s1 = inlined_call_operand.hbm [shape: f32[16,128], index: 1, kind: input, shape index: {}]
  %s2 = inlined_call_operand.hbm [shape: f32[1,8,128], index: 2, kind: output, shape index: {}]
  %s3 = sld [smem:[#allocation0]]
  $region34: #{tpu_custom_call.1} parent=0
    _
  %s5 = ssub.s32 1, %s3
  %s6 = scalar_select 0, %s5, %s3
  $region1: #{tpu_custom_call.1} parent=0
    #allocation3 [shape = 'u8[8192]{0}', space=vmem, size = 0x2000, scoped, tag = 'input window, operand 0, single buffered']
    #allocation4 [shape = 's32[1]{0}', space=sflag, size = 0x4, scoped, tag = 'scoped memory for tpu_custom_call.1']
    #allocation5 [shape = 's32[1]{0}', space=sflag, size = 0x4, scoped, tag = 'scoped memory for tpu_custom_call.1']
    #allocation6 [shape = 'u8[8192]{0}', space=vmem, size = 0x2000, scoped, tag = 'input window, operand 1, single buffered']
    #allocation7 [shape = 's32[1]{0}', space=sflag, size = 0x4, scoped, tag = 'scoped memory for tpu_custom_call.1']
    #allocation8 [shape = 'u8[4096]{0}', space=vmem, size = 0x1000, scoped, tag = 'output window, operand 0, single buffered']
    %7 = vsyncpa [#allocation4], 0
    %8 = vsyncpa [#allocation7], 0
    %9 = vsyncpa [#allocation5], 0
    // Predicated region
    $region2: #{tpu_custom_call.1} parent=1 // pred_check
      _
    $region3: #{tpu_custom_call.1} parent=1 // pred_check_branch
      %11 = sbr.rel (0) target = $region5
    $region4: #{tpu_custom_call.1} parent=1 // pred_region
      %s12 = sadd.s32 0, 0
      %p13 = scmp.lt.s32.totalorder %s12, 0
      %s14 = scalar_select %p13, %s12, 0
      %s15 = smul.u32 2, %s14
      %17 = vsyncadd [#allocation4], 0
      %s18 = smul.addr %s15, 8
      %s19 = scalar_lea.hbm %s0, %s18
      %s20 = sshll.u32 %s19, 4
      %s21 = int_to_ptr.hbm [resolvable:$true] %s20
      %s22 = sshll.u32 [#allocation3], 4
      %s23 = int_to_ptr.vmem [resolvable:$true] %s22
      %28 = dma.hbm_to_vmem [thread:$0]  %s21, 256, %s23, [#allocation4], 128, 128, 8
    $region5: #{tpu_custom_call.1} parent=1 // pred_fallthru
      _
    // Predicated region
    $region6: #{tpu_custom_call.1} parent=1 // pred_check
      _
    $region7: #{tpu_custom_call.1} parent=1 // pred_check_branch
      %30 = sbr.rel (0) target = $region9
    $region8: #{tpu_custom_call.1} parent=1 // pred_region
      %s31 = sadd.s32 0, 0
      %p32 = scmp.lt.s32.totalorder %s31, 0
      %s33 = scalar_select %p32, %s31, 0
      %s34 = smul.u32 2, %s33
      %36 = vsyncadd [#allocation7], 0
      %s37 = smul.addr %s34, 8
      %s38 = scalar_lea.hbm %s1, %s37
      %s39 = sshll.u32 %s38, 4
      %s40 = int_to_ptr.hbm [resolvable:$true] %s39
      %s41 = sshll.u32 [#allocation6], 4
      %s42 = int_to_ptr.vmem [resolvable:$true] %s41
      %47 = dma.hbm_to_vmem [thread:$0]  %s40, 256, %s42, [#allocation7], 128, 128, 8
    $region9: #{tpu_custom_call.1} parent=1 // pred_fallthru
      _
    // Predicated region
    $region10: #{tpu_custom_call.1} parent=1 // pred_check
      _
    $region11: #{tpu_custom_call.1} parent=1 // pred_check_branch
      %49 = sbr.rel (0) target = $region13
    $region12: #{tpu_custom_call.1} parent=1 // pred_region
      %51 = dma.done [#allocation4], 256
    $region13: #{tpu_custom_call.1} parent=1 // pred_fallthru
      _
    // Predicated region
    $region14: #{tpu_custom_call.1} parent=1 // pred_check
      _
    $region15: #{tpu_custom_call.1} parent=1 // pred_check_branch
      %53 = sbr.rel (0) target = $region17
    $region16: #{tpu_custom_call.1} parent=1 // pred_region
      %55 = dma.done [#allocation7], 256
    $region17: #{tpu_custom_call.1} parent=1 // pred_fallthru
      _
    %s56 = sadd.s32 0, 0
    %p57 = scmp.lt.s32.totalorder %s56, 0
    %s58 = scalar_select %p57, %s56, 0
    %s59 = smul.u32 2, %s58
    %s60 = sadd.s32 0, 0
    %p61 = scmp.lt.s32.totalorder %s60, 0
    %s62 = scalar_select %p61, %s60, 0
    %s63 = smul.u32 2, %s62
    %p64 = scmp.eq.s32.totalorder 0, 0
    // Predicated region
    $region18: #{tpu_custom_call.1} parent=1 // pred_check
      %p65 = pneg %p64
    $region19: #{tpu_custom_call.1} parent=1 // pred_check_branch
      %67 = sbr.rel (%p65) target = $region21
    $region20: #{tpu_custom_call.1} parent=1 // pred_region
      %68 = vst [vmem:[#allocation2] sm:$0xff] 0.0
    $region21: #{tpu_custom_call.1} parent=1 // pred_fallthru
      _
    %v69 = vld [vmem:[#allocation3] sm:$0xff]
    %v70 = vld [vmem:[#allocation3 + $0x8] sm:$0xff]
    %v71 = vld [vmem:[#allocation6] sm:$0xff]
    %v72 = vld [vmem:[#allocation6 + $0x8] sm:$0xff]
    %v73 = vsub.f32 %v71, %v69
    %v74 = vsub.f32 %v72, %v70
    %vm75 = vcmp.ge.f32.partialorder %v73, 0.0
    %vm76 = vcmp.ge.f32.partialorder %v74, 0.0
    %v77 = vsel %vm75, 0.9, -0.1
    %v78 = vsel %vm76, 0.9, -0.1
    %v79 = vmul.f32 %v73, %v77
    %v80 = vmul.f32 %v74, %v78
    %v81 = vld [vmem:[#allocation2] sm:$0xff]
    %v82 = vadd.f32 %v79, %v80
    %v83 = vadd.f32 %v81, %v82
    %84 = vst [vmem:[#allocation2] sm:$0xff] %v83
    // Predicated region
    $region22: #{tpu_custom_call.1} parent=1 // pred_check
      %p85 = pneg %p64
    $region23: #{tpu_custom_call.1} parent=1 // pred_check_branch
      %87 = sbr.rel (%p85) target = $region25
    $region24: #{tpu_custom_call.1} parent=1 // pred_region
      %v88 = vld [vmem:[#allocation2] sm:$0xff]
      %89 = vst [vmem:[#allocation8] sm:$0xff] %v88
    $region25: #{tpu_custom_call.1} parent=1 // pred_fallthru
      _
    // Predicated region
    $region26: #{tpu_custom_call.1} parent=1 // pred_check
      _
    $region27: #{tpu_custom_call.1} parent=1 // pred_check_branch
      %91 = sbr.rel (0) target = $region29
    $region28: #{tpu_custom_call.1} parent=1 // pred_region
      %93 = vsyncadd [#allocation5], 0
      %s95 = sshll.u32 [#allocation8], 4
      %s96 = int_to_ptr.vmem [resolvable:$true] %s95
      %s97 = sshll.u32 %s2, 4
      %s98 = int_to_ptr.hbm [resolvable:$true] %s97
      %100 = dma.vmem_to_hbm [thread:$0]  %s96, 128, %s98, [#allocation5]
    $region29: #{tpu_custom_call.1} parent=1 // pred_fallthru
      _
    // Predicated region
    $region30: #{tpu_custom_call.1} parent=1 // pred_check
      _
    $region31: #{tpu_custom_call.1} parent=1 // pred_check_branch
      %102 = sbr.rel (0) target = $region33
    $region32: #{tpu_custom_call.1} parent=1 // pred_region
      %104 = dma.done [#allocation5], 128
    $region33: #{tpu_custom_call.1} parent=1 // pred_fallthru
      _
    %105 = vsyncpa [#allocation4], 1
    %106 = vsyncpa [#allocation7], 1
    %107 = vsyncpa [#allocation5], 1

</llo_original>
